<compile_context>
chip_gen: v7x
topology: tpu7x:2x2x1
jax: 0.10.0
libtpu: 0.0.40
codegen_flags: <defaults>
</compile_context>

<pallas_src>
import functools

import jax
import jax.numpy as jnp
from jax.experimental import pallas as pl
from jax.experimental.pallas import tpu as pltpu


# --------------------------------------------------------------------------- #
# Stage 1: per-row L2 normalize, fold sqrt(1/T), cast to the MXU dtype.
# --------------------------------------------------------------------------- #
def _normalize_kernel(x_ref, o_ref, *, scale):
    x = x_ref[...].astype(jnp.float32)                        # (bn, dim)
    ss = jnp.sum(x * x, axis=1, keepdims=True)                # (bn, 1)
    # clamp ||v||^2 at 1e-24 == torch F.normalize eps=1e-12 clamp on ||v||
    xn = x * jax.lax.rsqrt(jnp.maximum(ss, 1e-24))
    o_ref[...] = (xn * scale).astype(o_ref.dtype)


# --------------------------------------------------------------------------- #
# Stage 2: streaming per-row NT-Xent loss:  logsumexp_j(sim_ij) - sim_ii.
# g has sqrt(1/T) folded in, so  sim = g_row @ g_key.T  is already divided by T.
# --------------------------------------------------------------------------- #
def _nt_xent_kernel(g_row_ref, g_key_ref, o_ref, l_scr, dg_scr, *, m_static):
    j = pl.program_id(1)

    @pl.when(j == 0)
    def _():
        gr = g_row_ref[...].astype(jnp.float32)
        # diagonal logit sim_ii = ||g_i||^2 (== 1/T except eps-clamped zero rows)
        dg_scr[...] = jnp.sum(gr * gr, axis=1, keepdims=True)
        l_scr[...] = jnp.zeros_like(l_scr)

    # Similarity tile on the MXU; contract the LAST dims of both operands
    # (no explicit transpose feeding the MXU).
    sim = jax.lax.dot_general(
        g_row_ref[...], g_key_ref[...],
        dimension_numbers=(((1,), (1,)), ((), ())),
        preferred_element_type=jnp.float32,
    )                                                          # (br, bk)

    # Static max: unit-normalized rows => sim_ij <= 1/T, so exp args <= ~0.
    # No running max / alpha rescale needed.
    l_scr[...] += jnp.sum(jnp.exp(sim - m_static), axis=1, keepdims=True)

    @pl.when(j == pl.num_programs(1) - 1)
    def _():
        o_ref[...] = (m_static + jnp.log(l_scr[...])) - dg_scr[...]


# --------------------------------------------------------------------------- #
# Tile selection / VMEM budgeting helpers.
# --------------------------------------------------------------------------- #
def _largest_tile(n, target, mult):
    """Largest block <= target that divides n and is a multiple of `mult`.
    Falls back to the full axis (always a legal block)."""
    if n <= target:
        return n
    for b in range(min(target, n - 1), mult - 1, -1):
        if n % b == 0 and b % mult == 0:
            return b
    return n


def _pick_row_block(bs, mult, target=512):
    # Prefer >= 2 row blocks so dimension_semantics=("parallel", ...) can shard
    # the row axis across both TensorCores on v7x.
    if bs % mult == 0 and bs >= 2 * mult:
        return _largest_tile(bs, min(target, bs // 2), mult)
    return _largest_tile(bs, target, mult)


def _vmem_bytes(br, bk, dim, itemsize):
    row_in = 2 * br * dim * itemsize          # double-buffered row blocks
    key_in = 2 * bk * dim * itemsize          # double-buffered key blocks
    sim = br * bk * 4                         # f32 similarity tile
    cols = 4 * br * 128 * 4                   # l/dg scratch + out (lane-padded)
    return row_in + key_in + sim + cols


# --------------------------------------------------------------------------- #
# Public wrapper (== ContrastiveLoss.forward).
# --------------------------------------------------------------------------- #
def contrastive_loss(features: jax.Array,
                     temperature: float = 0.5,
                     *,
                     block_rows: int | None = None,
                     block_keys: int | None = None,
                     mxu_dtype=jnp.bfloat16,
                     vmem_budget_bytes: int = 40 * 1024 * 1024) -> jax.Array:
    assert features.ndim == 2, "features must be (batch, dim)"
    bs, dim = features.shape
    inv_temp = 1.0 / float(temperature)
    itemsize = jnp.dtype(mxu_dtype).itemsize
    mult = 8 * (4 // itemsize)                # sublane multiple: 8 f32, 16 bf16

    # ---- tile selection --------------------------------------------------- #
    auto = block_rows is None and block_keys is None
    br = block_rows if block_rows is not None else _pick_row_block(bs, mult)
    if block_keys is not None:
        bk = block_keys
    elif bs * dim * itemsize <= vmem_budget_bytes // 3:
        bk = bs                               # normalized key matrix stays resident
    else:
        bk = _largest_tile(bs, 512, mult)

    if auto:
        # shrink tiles until the pipeline fits the VMEM budget
        while _vmem_bytes(br, bk, dim, itemsize) > vmem_budget_bytes:
            if bk >= br:
                nbk = _largest_tile(bs, bk // 2, mult)
                if nbk >= bk:
                    break
                bk = nbk
            else:
                nbr = _largest_tile(bs, br // 2, mult)
                if nbr >= br:
                    break
                br = nbr

    assert bs % br == 0 and (br % 8 == 0 or br == bs), (bs, br)
    assert bs % bk == 0 and (bk % 8 == 0 or bk == bs), (bs, bk)
    grid = (bs // br, bs // bk)

    vmem_limit = int(min(max(2 * _vmem_bytes(br, bk, dim, itemsize), 32 << 20),
                         64 << 20))

    # ---- stage 1: normalize once, fold sqrt(1/T), cast to MXU dtype ------- #
    g = pl.pallas_call(
        functools.partial(_normalize_kernel, scale=float(inv_temp ** 0.5)),
        out_shape=jax.ShapeDtypeStruct((bs, dim), mxu_dtype),
        grid=(bs // br,),
        in_specs=[pl.BlockSpec((br, dim), lambda i: (i, 0))],
        out_specs=pl.BlockSpec((br, dim), lambda i: (i, 0)),
        compiler_params=pltpu.CompilerParams(
            dimension_semantics=("parallel",),
            vmem_limit_bytes=vmem_limit),
    )(features.astype(jnp.float32))

    # ---- stage 2: streaming logsumexp - diagonal --------------------------- #
    per_row = pl.pallas_call(
        functools.partial(_nt_xent_kernel, m_static=float(inv_temp)),
        out_shape=jax.ShapeDtypeStruct((bs, 1), jnp.float32),
        grid_spec=pltpu.PrefetchScalarGridSpec(
            num_scalar_prefetch=0,
            grid=grid,
            in_specs=[
                pl.BlockSpec((br, dim), lambda i, j: (i, 0)),   # row block
                pl.BlockSpec((bk, dim), lambda i, j: (j, 0)),   # key block
            ],
            out_specs=pl.BlockSpec((br, 1), lambda i, j: (i, 0)),
            scratch_shapes=[
                pltpu.VMEM((br, 1), jnp.float32),   # running sum l_i
                pltpu.VMEM((br, 1), jnp.float32),   # diagonal logit
            ],
        ),
        compiler_params=pltpu.CompilerParams(
            dimension_semantics=("parallel", "arbitrary"),
            vmem_limit_bytes=vmem_limit),
    )(g, g)

    # final mean over rows: single tiny op outside the streaming loop
    return jnp.mean(per_row)


# --------------------------------------------------------------------------- #
# Pure-JAX reference (mirrors the PyTorch module exactly, f32).
# --------------------------------------------------------------------------- #
def _reference_contrastive_loss(features, temperature=0.5):
    f = features / jnp.maximum(
        jnp.linalg.norm(features, axis=1, keepdims=True), 1e-12)
    sim = (f @ f.T) / temperature
    lse = jax.scipy.special.logsumexp(sim, axis=1)
    return jnp.mean(lse - jnp.diagonal(sim))


if __name__ == "__main__":
    # Case 1: tiny toy shape (single grid point), f32 MXU path, tight tolerance.
    bs, dim = 8, 32
    x1 = jax.random.normal(jax.random.PRNGKey(0), (bs, dim), dtype=jnp.float32)
    loss1 = contrastive_loss(x1, temperature=0.5, mxu_dtype=jnp.float32)
    jax.block_until_ready(loss1)
    ref1 = _reference_contrastive_loss(x1, temperature=0.5)
    assert jnp.allclose(loss1, ref1, atol=1e-4, rtol=1e-4), (loss1, ref1)

    # Case 2: default config (bf16 MXU operands, resident key matrix, 2 row blocks).
    bs2, dim2 = 64, 128
    x2 = jax.random.normal(jax.random.PRNGKey(1), (bs2, dim2), dtype=jnp.float32)
    loss2 = contrastive_loss(x2, temperature=0.5)
    jax.block_until_ready(loss2)
    ref2 = _reference_contrastive_loss(x2, temperature=0.5)
    assert jnp.allclose(loss2, ref2, atol=5e-3, rtol=5e-3), (loss2, ref2)

    # Case 3: explicit small tiles -> exercises the multi-key-block streaming path.
    loss3 = contrastive_loss(x2, temperature=0.5, block_rows=16, block_keys=16)
    jax.block_until_ready(loss3)
    assert jnp.allclose(loss3, ref2, atol=5e-3, rtol=5e-3), (loss3, ref2)

    print("KERNEL_OK")
</pallas_src>

<mosaic_0001>
module attributes {stable_mosaic.version = 11 : i64} {
  func.func @_normalize_kernel(%arg0: i32, %arg1: memref<8x32xf32, #tpu.memory_space<vmem>>, %arg2: memref<8x32xf32, #tpu.memory_space<vmem>>) attributes {dimension_semantics = [#tpu.dimension_semantics<parallel>], iteration_bounds = array<i64: 1>, scalar_prefetch = 0 : i64, scratch_operands = 0 : i64, tpu.core_type = #tpu.core_type<tc>, window_params = [{transform_indices = @transform_0, window_bounds = array<i64: 8, 32>}, {transform_indices = @transform_1, window_bounds = array<i64: 8, 32>}]} {
    %c0 = arith.constant 0 : index
    %c0_0 = arith.constant 0 : index
    %0 = vector.load %arg1[%c0, %c0_0] : memref<8x32xf32, #tpu.memory_space<vmem>>, vector<8x32xf32>
    %1 = arith.mulf %0, %0 : vector<8x32xf32>
    %cst = arith.constant dense<0.000000e+00> : vector<8xf32>
    %2 = vector.multi_reduction <add>, %1, %cst [1] : vector<8x32xf32> to vector<8xf32>
    %3 = vector.shape_cast %2 : vector<8xf32> to vector<8x1xf32>
    %cst_1 = arith.constant 1.000000e-24 : f32
    %4 = vector.broadcast %cst_1 : f32 to vector<8x1xf32>
    %5 = arith.maximumf %3, %4 : vector<8x1xf32>
    %6 = math.rsqrt %5 : vector<8x1xf32>
    %7 = vector.broadcast %6 : vector<8x1xf32> to vector<8x32xf32>
    %8 = arith.mulf %0, %7 : vector<8x32xf32>
    %cst_2 = arith.constant 1.41421354 : f32
    %9 = vector.broadcast %cst_2 : f32 to vector<8x32xf32>
    %10 = arith.mulf %8, %9 : vector<8x32xf32>
    %c0_3 = arith.constant 0 : index
    %c0_4 = arith.constant 0 : index
    %11 = vector.load %arg2[%c0_3, %c0_4] : memref<8x32xf32, #tpu.memory_space<vmem>>, vector<8x32xf32>
    tpu.vector_store %arg2[%c0_3, %c0_4], %10 {strides = array<i32>} : memref<8x32xf32, #tpu.memory_space<vmem>>, vector<8x32xf32>,
    return
  }
  func.func @transform_0(%arg0: i32) -> (i32, i32) {
    %c0_i32 = arith.constant 0 : i32
    %c0_i32_0 = arith.constant 0 : i32
    return %arg0, %c0_i32 : i32, i32
  }
  func.func @transform_1(%arg0: i32) -> (i32, i32) {
    %c0_i32 = arith.constant 0 : i32
    %c0_i32_0 = arith.constant 0 : i32
    return %arg0, %c0_i32 : i32, i32
  }
}

</mosaic_0001>

<llo_original>
// kernel: tpu_custom_call.1
$region0: #{tpu_custom_call.1}
  #allocation0 [shape = 'u32[]', space=smem, size = 0x4, offset = 0x4, fixed_abs, tag = 'smem constant byte address 0x4 - core index']
  #allocation1 [shape = 'u32[144,128]{1,0:T(1,128)}', space=vmem, size = 0x12000, scoped, tag = 'internal scratch']
  %s0 = inlined_call_operand.hbm [shape: f32[8,32], index: 0, kind: input, shape index: {}]
  %s1 = inlined_call_operand.hbm [shape: f32[8,32], index: 1, kind: output, shape index: {}]
  %s2 = sld [smem:[#allocation0]]
  $region18: #{tpu_custom_call.1} parent=0
    _
  %s4 = ssub.s32 1, %s2
  %s5 = scalar_select 0, %s4, %s2
  $region1: #{tpu_custom_call.1} parent=0
    #allocation2 [shape = 'u8[4096]{0}', space=vmem, size = 0x1000, scoped, tag = 'input window, operand 0, single buffered']
    #allocation3 [shape = 's32[1]{0}', space=sflag, size = 0x4, scoped, tag = 'scoped memory for tpu_custom_call.1']
    #allocation4 [shape = 's32[1]{0}', space=sflag, size = 0x4, scoped, tag = 'scoped memory for tpu_custom_call.1']
    #allocation5 [shape = 'u8[4096]{0}', space=vmem, size = 0x1000, scoped, tag = 'output window, operand 0, single buffered']
    %6 = vsyncpa [#allocation3], 0
    %7 = vsyncpa [#allocation4], 0
    // Predicated region
    $region2: #{tpu_custom_call.1} parent=1 // pred_check
      _
    $region3: #{tpu_custom_call.1} parent=1 // pred_check_branch
      %9 = sbr.rel (0) target = $region5
    $region4: #{tpu_custom_call.1} parent=1 // pred_region
      %s11 = ssub.s32 128, 128
      %12 = vsyncadd [#allocation3], %s11
      %s14 = sshll.u32 [#allocation2], 4
      %s15 = int_to_ptr.vmem [resolvable:$true] %s14
      %17 = dma.hbm_to_vmem [thread:$0]  %s0, 128, %s15, [#allocation3]
    $region5: #{tpu_custom_call.1} parent=1 // pred_fallthru
      _
    // Predicated region
    $region6: #{tpu_custom_call.1} parent=1 // pred_check
      _
    $region7: #{tpu_custom_call.1} parent=1 // pred_check_branch
      %19 = sbr.rel (0) target = $region9
    $region8: #{tpu_custom_call.1} parent=1 // pred_region
      %20 = dma.done [#allocation3], 128
    $region9: #{tpu_custom_call.1} parent=1 // pred_fallthru
      _
    %v21 = vld [vmem:[#allocation2] sm:$0xff]
    %v22 = vmul.f32 %v21, %v21
    %vm23 = vcmask 261120
    %v24 = vsel %vm23, %v22, 0.0
    %25 = vadd.xlane.f32.xlu0 %v24
    %v26 = vpop.xlane.xlu0 %25
    %v27 = vmax.f32 %v26, 1e-24
    %v28 = vrsqrt.pop %v27
    %v29 = vmul.f32 %v21, %v28
    %v30 = vmul.f32 %v29, 1.4142135
    %31 = vst.msk [vmem:[#allocation5] sm:$0xff] %vm23, %v30
    // Predicated region
    $region10: #{tpu_custom_call.1} parent=1 // pred_check
      _
    $region11: #{tpu_custom_call.1} parent=1 // pred_check_branch
      %33 = sbr.rel (0) target = $region13
    $region12: #{tpu_custom_call.1} parent=1 // pred_region
      %s35 = ssub.s32 128, 128
      %36 = vsyncadd [#allocation4], %s35
      %s38 = sshll.u32 [#allocation5], 4
      %s39 = int_to_ptr.vmem [resolvable:$true] %s38
      %41 = dma.vmem_to_hbm [thread:$0]  %s39, 128, %s1, [#allocation4]
    $region13: #{tpu_custom_call.1} parent=1 // pred_fallthru
      _
    // Predicated region
    $region14: #{tpu_custom_call.1} parent=1 // pred_check
      _
    $region15: #{tpu_custom_call.1} parent=1 // pred_check_branch
      %43 = sbr.rel (0) target = $region17
    $region16: #{tpu_custom_call.1} parent=1 // pred_region
      %44 = dma.done [#allocation4], 128
    $region17: #{tpu_custom_call.1} parent=1 // pred_fallthru
      _
    %45 = vsyncpa [#allocation3], 1
    %46 = vsyncpa [#allocation4], 1

</llo_original>
